<compile_context>
chip_gen: v7x
topology: tpu7x:2x2x1
jax: 0.10.0
libtpu: 0.0.40
codegen_flags: <defaults>
</compile_context>

<pallas_src>
import functools

import jax
import jax.numpy as jnp
from jax.experimental import pallas as pl
from jax.experimental.pallas import tpu as pltpu

LANE = 128                       # lane width: last-dim tiling unit
SUBLANE = 8                      # sublane width: second-to-last-dim tiling unit
VMEM_LIMIT = 32 * 1024 * 1024    # scoped-VMEM target; safe on v5e/v6e/v7x


def _round_up(n, m):
    return (n + m - 1) // m * m


def _mlp_kernel(*refs, num_layers, use_bf16):
    """Fused MLP: h = x; for each layer h = h @ W + b; tanh on all but last.

    refs = (x_ref, w0_ref, b0_ref, ..., w{L-1}_ref, b{L-1}_ref, out_ref).
    Matmuls run on the MXU with f32 accumulation; bias-add on the VPU, tanh on
    the EUP.  Hidden activations are lane-dense (128-multiples); the first
    matmul's K dim and the last matmul's N dim keep their native widths.
    """
    x_ref = refs[0]
    out_ref = refs[-1]
    param_refs = refs[1:-1]

    h = x_ref[...]
    for layer in range(num_layers):
        w = param_refs[2 * layer][...]
        b = param_refs[2 * layer + 1][...]          # (1, fo): broadcasts over rows
        lhs = h.astype(jnp.bfloat16) if use_bf16 else h
        h = jnp.dot(lhs, w, preferred_element_type=jnp.float32) + b
        if layer != num_layers - 1:
            h = jnp.tanh(h)
    out_ref[...] = h.astype(out_ref.dtype)


def _resident_spec(shape, single_buffer):
    """BlockSpec for a weight/bias that never changes across grid steps.

    Constant index map -> the block stays VMEM-resident (no re-DMA per step).
    With single_buffer, pipeline_mode=pl.Buffered(1) drops the pointless second
    pipeline buffer, halving resident weight VMEM (matters for wide hiddens,
    especially on v7x's 64 MiB VMEM).
    """
    index_map = lambda *_: (0,) * len(shape)
    if single_buffer:
        return pl.BlockSpec(shape, index_map, pipeline_mode=pl.Buffered(1))
    return pl.BlockSpec(shape, index_map)


def _choose_batch_tile(batch, tile_cap):
    """Pick the batch tile: multiple of 8, <= tile_cap, >=2 grid steps when the
    batch allows (v7x has 2 TensorCores), and <~10% padded-row waste."""
    tile_cap = max(SUBLANE, (tile_cap // SUBLANE) * SUBLANE)
    batch8 = _round_up(batch, SUBLANE)
    if batch8 < 2 * SUBLANE:                 # too small to split across cores
        return min(batch8, tile_cap)
    # Largest tile still giving at least two grid steps.
    tb = min(tile_cap, _round_up((batch8 + 1) // 2, SUBLANE))
    # Shrink until batch padding wastes at most ~10% of rows.
    while tb > SUBLANE and _round_up(batch, tb) > 1.1 * batch + SUBLANE:
        tb -= SUBLANE
    return tb


def branchnet_forward(x, params, *, use_bf16=False, max_batch_tile=4096,
                      vmem_limit_bytes=VMEM_LIMIT):
    """Run the BranchNet MLP via a single batch-tiled pallas_call.

    Args:
      x: [batch, input_dim] float32.
      params: list of (W, b) with W: [in, out] (transpose of PyTorch Linear's
        [out, in]), b: [out].
      use_bf16: bf16 matmul inputs with f32 accumulation (v6e/v7x MXU-native).
      max_batch_tile: user cap on tile rows (further capped by the VMEM budget).
      vmem_limit_bytes: scoped-VMEM limit passed to the compiler.
    Returns:
      [batch, output_dim] float32.
    """
    num_layers = len(params)
    batch, input_dim = x.shape
    out_dim = params[-1][0].shape[1]

    # ---- Feature widths inside the kernel. ------------------------------
    #  input  : native width (no pad copy; x is the dominant HBM stream)
    #  hidden : zero-padded to 128-multiples (lane-dense MXU/VPU tiles, exact)
    #  output : native width (cuts output HBM traffic and drops the feature
    #           slice; masked stores are cheaper than the extra HBM pass)
    widths = [input_dim]
    for (w, _) in params[:-1]:
        widths.append(_round_up(w.shape[1], LANE))
    widths.append(out_dim)

    wt_dtype = jnp.bfloat16 if use_bf16 else jnp.float32
    padded_params = []
    for li, (w, b) in enumerate(params):
        fi, fo = w.shape
        fi_p, fo_p = widths[li], widths[li + 1]
        if (fi_p, fo_p) == (fi, fo):
            w_pad = w.astype(wt_dtype)
            b_pad = b.astype(jnp.float32).reshape(1, fo)
        else:
            w_pad = jnp.zeros((fi_p, fo_p), wt_dtype).at[:fi, :fo].set(
                w.astype(wt_dtype))
            b_pad = jnp.zeros((1, fo_p), jnp.float32).at[0, :fo].set(b)
        padded_params.append((w_pad, b_pad))

    # ---- VMEM budget -> max tile rows. -----------------------------------
    weight_bytes = sum(int(w.size) * w.dtype.itemsize + int(b.size) * 4
                       for w, b in padded_params)
    widest = max(widths)
    # Per row: double-buffered f32 x/out tiles + two live f32 activation temps
    # of the widest layer.  Weights counted twice (in case single-buffering of
    # the constant-index blocks is not honored) + 2 MiB slack for internals.
    per_row_bytes = 4 * (2 * input_dim + 2 * out_dim + 2 * widest)
    budget = vmem_limit_bytes - 2 * weight_bytes - (2 << 20)
    vmem_cap = max(SUBLANE, (budget // per_row_bytes) // SUBLANE * SUBLANE)

    tb = _choose_batch_tile(batch, min(max_batch_tile, vmem_cap))
    batch_p = _round_up(batch, tb)
    grid = (batch_p // tb,)

    if batch_p != batch:
        x_in = jnp.zeros((batch_p, input_dim), jnp.float32).at[:batch].set(x)
    else:
        x_in = x

    flat_params = [a for wb in padded_params for a in wb]

    # ---- Advisory cost estimate from TRUE (unpadded) dims. ----------------
    flops = 0
    transcendentals = 0
    bytes_accessed = (int(x.size) + batch * out_dim) * 4
    for li, (w, b) in enumerate(params):
        fi, fo = w.shape
        flops += 2 * batch * fi * fo
        bytes_accessed += int(w.size) * (2 if use_bf16 else 4) + int(b.size) * 4
        if li != num_layers - 1:
            transcendentals += batch * fo

    kernel = functools.partial(_mlp_kernel, num_layers=num_layers,
                               use_bf16=use_bf16)

    def run(single_buffer_weights):
        in_specs = [pl.BlockSpec((tb, input_dim), lambda i: (i, 0))]
        for (w_pad, b_pad) in padded_params:
            in_specs.append(_resident_spec(w_pad.shape, single_buffer_weights))
            in_specs.append(_resident_spec(b_pad.shape, single_buffer_weights))
        return pl.pallas_call(
            kernel,
            out_shape=jax.ShapeDtypeStruct((batch_p, out_dim), jnp.float32),
            grid=grid,
            in_specs=in_specs,
            out_specs=pl.BlockSpec((tb, out_dim), lambda i: (i, 0)),
            compiler_params=pltpu.CompilerParams(
                dimension_semantics=("parallel",),   # megacore on v7x
                vmem_limit_bytes=vmem_limit_bytes,
            ),
            cost_estimate=pl.CostEstimate(
                flops=flops,
                transcendentals=transcendentals,
                bytes_accessed=bytes_accessed,
            ),
        )(x_in, *flat_params)

    try:
        out_padded = run(True)        # single-buffered resident weights
    except Exception:                 # pipeline_mode=Buffered(1) unsupported here
        out_padded = run(False)       # fall back to default double-buffering

    return out_padded if batch_p == batch else out_padded[:batch]


def init_branchnet_params(key, layer_dims):
    """Deterministic init of the MLP parameters (PyTorch-Linear-like scaling)."""
    params = []
    for i in range(len(layer_dims) - 1):
        fan_in, fan_out = layer_dims[i], layer_dims[i + 1]
        key, kw, kb = jax.random.split(key, 3)
        bound = 1.0 / jnp.sqrt(fan_in)
        w = jax.random.uniform(kw, (fan_in, fan_out), jnp.float32, -bound, bound)
        b = jax.random.uniform(kb, (fan_out,), jnp.float32, -bound, bound)
        params.append((w, b))
    return params


if __name__ == "__main__":
    # BranchNet(input_dim=16, hidden_dims=[32, 32], output_dim=32)
    input_dim = 16
    hidden_dims = [32, 32]
    output_dim = 32
    layer_dims = [input_dim] + hidden_dims + [output_dim]

    key = jax.random.PRNGKey(0)
    key, kx = jax.random.split(key)
    params = init_branchnet_params(key, layer_dims)

    def ref_forward(xx):
        h = xx
        for i, (w, b) in enumerate(params):
            h = h @ w + b
            if i != len(params) - 1:
                h = jnp.tanh(h)
        return h

    # 1) Small batch (single grid step).
    x = jax.random.normal(kx, (8, input_dim), dtype=jnp.float32)
    out = jax.block_until_ready(branchnet_forward(x, params))
    assert out.shape == (8, output_dim)
    assert jnp.allclose(out, ref_forward(x), atol=1e-5, rtol=1e-5)

    # 2) Multi-tile grid + ragged batch (exercises index_map and batch padding).
    key, kx2 = jax.random.split(key)
    x_multi = jax.random.normal(kx2, (50, input_dim), dtype=jnp.float32)
    out_multi = jax.block_until_ready(
        branchnet_forward(x_multi, params, max_batch_tile=16))
    assert out_multi.shape == (50, output_dim)
    assert jnp.allclose(out_multi, ref_forward(x_multi), atol=1e-5, rtol=1e-5)

    # 3) Optional bf16 matmul path (v6e/v7x MXU-native; looser tolerance).
    out_bf16 = jax.block_until_ready(branchnet_forward(x, params, use_bf16=True))
    assert jnp.allclose(out_bf16, ref_forward(x), atol=5e-2, rtol=5e-2)

    print("KERNEL_OK")
</pallas_src>

<mosaic_0001>
module attributes {stable_mosaic.version = 11 : i64} {
  func.func @_mlp_kernel(%arg0: i32, %arg1: memref<8x16xf32, #tpu.memory_space<vmem>>, %arg2: memref<16x128xf32, #tpu.memory_space<vmem>>, %arg3: memref<1x128xf32, #tpu.memory_space<vmem>>, %arg4: memref<128x128xf32, #tpu.memory_space<vmem>>, %arg5: memref<1x128xf32, #tpu.memory_space<vmem>>, %arg6: memref<128x32xf32, #tpu.memory_space<vmem>>, %arg7: memref<1x32xf32, #tpu.memory_space<vmem>>, %arg8: memref<8x32xf32, #tpu.memory_space<vmem>>) attributes {dimension_semantics = [#tpu.dimension_semantics<parallel>], iteration_bounds = array<i64: 1>, scalar_prefetch = 0 : i64, scratch_operands = 0 : i64, tpu.core_type = #tpu.core_type<tc>, window_params = [{transform_indices = @transform_0, window_bounds = array<i64: 8, 16>}, {pipeline_mode = #tpu.pipeline_mode<synchronous>, transform_indices = @transform_1, window_bounds = array<i64: 16, 128>}, {pipeline_mode = #tpu.pipeline_mode<synchronous>, transform_indices = @transform_2, window_bounds = array<i64: 1, 128>}, {pipeline_mode = #tpu.pipeline_mode<synchronous>, transform_indices = @transform_3, window_bounds = array<i64: 128, 128>}, {pipeline_mode = #tpu.pipeline_mode<synchronous>, transform_indices = @transform_4, window_bounds = array<i64: 1, 128>}, {pipeline_mode = #tpu.pipeline_mode<synchronous>, transform_indices = @transform_5, window_bounds = array<i64: 128, 32>}, {pipeline_mode = #tpu.pipeline_mode<synchronous>, transform_indices = @transform_6, window_bounds = array<i64: 1, 32>}, {transform_indices = @transform_7, window_bounds = array<i64: 8, 32>}]} {
    %c0 = arith.constant 0 : index
    %c0_0 = arith.constant 0 : index
    %0 = vector.load %arg1[%c0, %c0_0] : memref<8x16xf32, #tpu.memory_space<vmem>>, vector<8x16xf32>
    %c0_1 = arith.constant 0 : index
    %c0_2 = arith.constant 0 : index
    %1 = vector.load %arg2[%c0_1, %c0_2] : memref<16x128xf32, #tpu.memory_space<vmem>>, vector<16x128xf32>
    %c0_3 = arith.constant 0 : index
    %c0_4 = arith.constant 0 : index
    %2 = vector.load %arg3[%c0_3, %c0_4] : memref<1x128xf32, #tpu.memory_space<vmem>>, vector<1x128xf32>
    %cst = arith.constant dense<0.000000e+00> : vector<8x128xf32>
    %3 = tpu.matmul %0, %1, %cst {dimension_numbers = #tpu.dot_dimension_numbers<[1], [0], [0], [1], [0, 0, 1, 1], [], []>} : vector<8x16xf32>, vector<16x128xf32>, vector<8x128xf32> -> vector<8x128xf32>
    %4 = vector.broadcast %2 : vector<1x128xf32> to vector<8x128xf32>
    %5 = arith.addf %3, %4 : vector<8x128xf32>
    %6 = math.tanh %5 : vector<8x128xf32>
    %c0_5 = arith.constant 0 : index
    %c0_6 = arith.constant 0 : index
    %7 = vector.load %arg4[%c0_5, %c0_6] : memref<128x128xf32, #tpu.memory_space<vmem>>, vector<128x128xf32>
    %c0_7 = arith.constant 0 : index
    %c0_8 = arith.constant 0 : index
    %8 = vector.load %arg5[%c0_7, %c0_8] : memref<1x128xf32, #tpu.memory_space<vmem>>, vector<1x128xf32>
    %cst_9 = arith.constant dense<0.000000e+00> : vector<8x128xf32>
    %9 = tpu.matmul %6, %7, %cst_9 {dimension_numbers = #tpu.dot_dimension_numbers<[1], [0], [0], [1], [0, 0, 1, 1], [], []>} : vector<8x128xf32>, vector<128x128xf32>, vector<8x128xf32> -> vector<8x128xf32>
    %10 = vector.broadcast %8 : vector<1x128xf32> to vector<8x128xf32>
    %11 = arith.addf %9, %10 : vector<8x128xf32>
    %12 = math.tanh %11 : vector<8x128xf32>
    %c0_10 = arith.constant 0 : index
    %c0_11 = arith.constant 0 : index
    %13 = vector.load %arg6[%c0_10, %c0_11] : memref<128x32xf32, #tpu.memory_space<vmem>>, vector<128x32xf32>
    %c0_12 = arith.constant 0 : index
    %c0_13 = arith.constant 0 : index
    %14 = vector.load %arg7[%c0_12, %c0_13] : memref<1x32xf32, #tpu.memory_space<vmem>>, vector<1x32xf32>
    %cst_14 = arith.constant dense<0.000000e+00> : vector<8x32xf32>
    %15 = tpu.matmul %12, %13, %cst_14 {dimension_numbers = #tpu.dot_dimension_numbers<[1], [0], [0], [1], [0, 0, 1, 1], [], []>} : vector<8x128xf32>, vector<128x32xf32>, vector<8x32xf32> -> vector<8x32xf32>
    %16 = vector.broadcast %14 : vector<1x32xf32> to vector<8x32xf32>
    %17 = arith.addf %15, %16 : vector<8x32xf32>
    %c0_15 = arith.constant 0 : index
    %c0_16 = arith.constant 0 : index
    %18 = vector.load %arg8[%c0_15, %c0_16] : memref<8x32xf32, #tpu.memory_space<vmem>>, vector<8x32xf32>
    tpu.vector_store %arg8[%c0_15, %c0_16], %17 {strides = array<i32>} : memref<8x32xf32, #tpu.memory_space<vmem>>, vector<8x32xf32>,
    return
  }
  func.func @transform_0(%arg0: i32) -> (i32, i32) {
    %c0_i32 = arith.constant 0 : i32
    %c0_i32_0 = arith.constant 0 : i32
    return %arg0, %c0_i32 : i32, i32
  }
  func.func @transform_1(%arg0: i32) -> (i32, i32) {
    %c0_i32 = arith.constant 0 : i32
    %c0_i32_0 = arith.constant 0 : i32
    %c0_i32_1 = arith.constant 0 : i32
    return %c0_i32, %c0_i32_0 : i32, i32
  }
  func.func @transform_2(%arg0: i32) -> (i32, i32) {
    %c0_i32 = arith.constant 0 : i32
    %c0_i32_0 = arith.constant 0 : i32
    %c0_i32_1 = arith.constant 0 : i32
    return %c0_i32, %c0_i32_0 : i32, i32
  }
  func.func @transform_3(%arg0: i32) -> (i32, i32) {
    %c0_i32 = arith.constant 0 : i32
    %c0_i32_0 = arith.constant 0 : i32
    %c0_i32_1 = arith.constant 0 : i32
    return %c0_i32, %c0_i32_0 : i32, i32
  }
  func.func @transform_4(%arg0: i32) -> (i32, i32) {
    %c0_i32 = arith.constant 0 : i32
    %c0_i32_0 = arith.constant 0 : i32
    %c0_i32_1 = arith.constant 0 : i32
    return %c0_i32, %c0_i32_0 : i32, i32
  }
  func.func @transform_5(%arg0: i32) -> (i32, i32) {
    %c0_i32 = arith.constant 0 : i32
    %c0_i32_0 = arith.constant 0 : i32
    %c0_i32_1 = arith.constant 0 : i32
    return %c0_i32, %c0_i32_0 : i32, i32
  }
  func.func @transform_6(%arg0: i32) -> (i32, i32) {
    %c0_i32 = arith.constant 0 : i32
    %c0_i32_0 = arith.constant 0 : i32
    %c0_i32_1 = arith.constant 0 : i32
    return %c0_i32, %c0_i32_0 : i32, i32
  }
  func.func @transform_7(%arg0: i32) -> (i32, i32) {
    %c0_i32 = arith.constant 0 : i32
    %c0_i32_0 = arith.constant 0 : i32
    return %arg0, %c0_i32 : i32, i32
  }
}

module attributes {stable_mosaic.version = 11 : i64} {
  func.func @_mlp_kernel(%arg0: i32, %arg1: memref<8x16xf32, #tpu.memory_space<vmem>>, %arg2: memref<16x128xf32, #tpu.memory_space<vmem>>, %arg3: memref<1x128xf32, #tpu.memory_space<vmem>>, %arg4: memref<128x128xf32, #tpu.memory_space<vmem>>, %arg5: memref<1x128xf32, #tpu.memory_space<vmem>>, %arg6: memref<128x32xf32, #tpu.memory_space<vmem>>, %arg7: memref<1x32xf32, #tpu.memory_space<vmem>>, %arg8: memref<8x32xf32, #tpu.memory_space<vmem>>) attributes {dimension_semantics = [#tpu.dimension_semantics<parallel>], iteration_bounds = array<i64: 1>, scalar_prefetch = 0 : i64, scratch_operands = 0 : i64, tpu.core_type = #tpu.core_type<tc>, window_params = [{transform_indices = @transform_0, window_bounds = array<i64: 8, 16>}, {pipeline_mode = #tpu.pipeline_mode<synchronous>, transform_indices = @transform_1, window_bounds = array<i64: 16, 128>}, {pipeline_mode = #tpu.pipeline_mode<synchronous>, transform_indices = @transform_2, window_bounds = array<i64: 1, 128>}, {pipeline_mode = #tpu.pipeline_mode<synchronous>, transform_indices = @transform_3, window_bounds = array<i64: 128, 128>}, {pipeline_mode = #tpu.pipeline_mode<synchronous>, transform_indices = @transform_4, window_bounds = array<i64: 1, 128>}, {pipeline_mode = #tpu.pipeline_mode<synchronous>, transform_indices = @transform_5, window_bounds = array<i64: 128, 32>}, {pipeline_mode = #tpu.pipeline_mode<synchronous>, transform_indices = @transform_6, window_bounds = array<i64: 1, 32>}, {transform_indices = @transform_7, window_bounds = array<i64: 8, 32>}]} {
    %c0 = arith.constant 0 : index
    %c0_0 = arith.constant 0 : index
    %0 = vector.load %arg1[%c0, %c0_0] : memref<8x16xf32, #tpu.memory_space<vmem>>, vector<8x16xf32>
    %c0_1 = arith.constant 0 : index
    %c0_2 = arith.constant 0 : index
    %1 = vector.load %arg2[%c0_1, %c0_2] : memref<16x128xf32, #tpu.memory_space<vmem>>, vector<16x128xf32>
    %c0_3 = arith.constant 0 : index
    %c0_4 = arith.constant 0 : index
    %2 = vector.load %arg3[%c0_3, %c0_4] : memref<1x128xf32, #tpu.memory_space<vmem>>, vector<1x128xf32>
    %cst = arith.constant dense<0.000000e+00> : vector<8x128xf32>
    %3 = tpu.matmul %0, %1, %cst {dimension_numbers = #tpu.dot_dimension_numbers<[1], [0], [0], [1], [0, 0, 1, 1], [], []>} : vector<8x16xf32>, vector<16x128xf32>, vector<8x128xf32> -> vector<8x128xf32>
    %4 = vector.broadcast %2 : vector<1x128xf32> to vector<8x128xf32>
    %5 = arith.addf %3, %4 : vector<8x128xf32>
    %6 = math.tanh %5 : vector<8x128xf32>
    %c0_5 = arith.constant 0 : index
    %c0_6 = arith.constant 0 : index
    %7 = vector.load %arg4[%c0_5, %c0_6] : memref<128x128xf32, #tpu.memory_space<vmem>>, vector<128x128xf32>
    %c0_7 = arith.constant 0 : index
    %c0_8 = arith.constant 0 : index
    %8 = vector.load %arg5[%c0_7, %c0_8] : memref<1x128xf32, #tpu.memory_space<vmem>>, vector<1x128xf32>
    %cst_9 = arith.constant dense<0.000000e+00> : vector<8x128xf32>
    %9 = tpu.matmul %6, %7, %cst_9 {dimension_numbers = #tpu.dot_dimension_numbers<[1], [0], [0], [1], [0, 0, 1, 1], [], []>} : vector<8x128xf32>, vector<128x128xf32>, vector<8x128xf32> -> vector<8x128xf32>
    %10 = vector.broadcast %8 : vector<1x128xf32> to vector<8x128xf32>
    %11 = arith.addf %9, %10 : vector<8x128xf32>
    %12 = math.tanh %11 : vector<8x128xf32>
    %c0_10 = arith.constant 0 : index
    %c0_11 = arith.constant 0 : index
    %13 = vector.load %arg6[%c0_10, %c0_11] : memref<128x32xf32, #tpu.memory_space<vmem>>, vector<128x32xf32>
    %c0_12 = arith.constant 0 : index
    %c0_13 = arith.constant 0 : index
    %14 = vector.load %arg7[%c0_12, %c0_13] : memref<1x32xf32, #tpu.memory_space<vmem>>, vector<1x32xf32>
    %cst_14 = arith.constant dense<0.000000e+00> : vector<8x32xf32>
    %15 = tpu.matmul %12, %13, %cst_14 {dimension_numbers = #tpu.dot_dimension_numbers<[1], [0], [0], [1], [0, 0, 1, 1], [], []>} : vector<8x128xf32>, vector<128x32xf32>, vector<8x32xf32> -> vector<8x32xf32>
    %16 = vector.broadcast %14 : vector<1x32xf32> to vector<8x32xf32>
    %17 = arith.addf %15, %16 : vector<8x32xf32>
    %c0_15 = arith.constant 0 : index
    %c0_16 = arith.constant 0 : index
    %18 = vector.load %arg8[%c0_15, %c0_16] : memref<8x32xf32, #tpu.memory_space<vmem>>, vector<8x32xf32>
    tpu.vector_store %arg8[%c0_15, %c0_16], %17 {strides = array<i32>} : memref<8x32xf32, #tpu.memory_space<vmem>>, vector<8x32xf32>,
    return
  }
  func.func @transform_0(%arg0: i32) -> (i32, i32) {
    %c0_i32 = arith.constant 0 : i32
    %c0_i32_0 = arith.constant 0 : i32
    return %arg0, %c0_i32 : i32, i32
  }
  func.func @transform_1(%arg0: i32) -> (i32, i32) {
    %c0_i32 = arith.constant 0 : i32
    %c0_i32_0 = arith.constant 0 : i32
    %c0_i32_1 = arith.constant 0 : i32
    return %c0_i32, %c0_i32_0 : i32, i32
  }
  func.func @transform_2(%arg0: i32) -> (i32, i32) {
    %c0_i32 = arith.constant 0 : i32
    %c0_i32_0 = arith.constant 0 : i32
    %c0_i32_1 = arith.constant 0 : i32
    return %c0_i32, %c0_i32_0 : i32, i32
  }
  func.func @transform_3(%arg0: i32) -> (i32, i32) {
    %c0_i32 = arith.constant 0 : i32
    %c0_i32_0 = arith.constant 0 : i32
    %c0_i32_1 = arith.constant 0 : i32
    return %c0_i32, %c0_i32_0 : i32, i32
  }
  func.func @transform_4(%arg0: i32) -> (i32, i32) {
    %c0_i32 = arith.constant 0 : i32
    %c0_i32_0 = arith.constant 0 : i32
    %c0_i32_1 = arith.constant 0 : i32
    return %c0_i32, %c0_i32_0 : i32, i32
  }
  func.func @transform_5(%arg0: i32) -> (i32, i32) {
    %c0_i32 = arith.constant 0 : i32
    %c0_i32_0 = arith.constant 0 : i32
    %c0_i32_1 = arith.constant 0 : i32
    return %c0_i32, %c0_i32_0 : i32, i32
  }
  func.func @transform_6(%arg0: i32) -> (i32, i32) {
    %c0_i32 = arith.constant 0 : i32
    %c0_i32_0 = arith.constant 0 : i32
    %c0_i32_1 = arith.constant 0 : i32
    return %c0_i32, %c0_i32_0 : i32, i32
  }
  func.func @transform_7(%arg0: i32) -> (i32, i32) {
    %c0_i32 = arith.constant 0 : i32
    %c0_i32_0 = arith.constant 0 : i32
    return %arg0, %c0_i32 : i32, i32
  }
}

</mosaic_0001>

<llo_original>
// kernel: tpu_custom_call.1
$region0: #{tpu_custom_call.1}
  #allocation0 [shape = 'u32[]', space=smem, size = 0x4, offset = 0x4, fixed_abs, tag = 'smem constant byte address 0x4 - core index']
  #allocation1 [shape = 'u32[144,128]{1,0:T(1,128)}', space=vmem, size = 0x12000, scoped, tag = 'internal scratch']
  %s0 = inlined_call_operand.vmem [shape: f32[8,16], index: 0, kind: input, shape index: {}]
  %s1 = inlined_call_operand.vmem [shape: f32[16,128], index: 1, kind: input, shape index: {}]
  %s2 = inlined_call_operand.vmem [shape: f32[1,128], index: 2, kind: input, shape index: {}]
  %s3 = inlined_call_operand.vmem [shape: f32[128,128], index: 3, kind: input, shape index: {}]
  %s4 = inlined_call_operand.vmem [shape: f32[1,128], index: 4, kind: input, shape index: {}]
  %s5 = inlined_call_operand.vmem [shape: f32[128,32], index: 5, kind: input, shape index: {}]
  %s6 = inlined_call_operand.vmem [shape: f32[1,32], index: 6, kind: input, shape index: {}]
  %s7 = inlined_call_operand.hbm [shape: f32[8,32], index: 7, kind: output, shape index: {}]
  %s8 = sld [smem:[#allocation0]]
  $region38: #{tpu_custom_call.1} parent=0
    _
  %s10 = ssub.s32 1, %s8
  %s11 = scalar_select 0, %s10, %s8
  $region1: #{tpu_custom_call.1} parent=0
    #allocation2 [shape = 'u8[4096]{0}', space=vmem, size = 0x1000, scoped, tag = 'output window, operand 0, single buffered']
    #allocation3 [shape = 's32[1]{0}', space=sflag, size = 0x4, scoped, tag = 'scoped memory for tpu_custom_call.1']
    %12 = vsyncpa [#allocation3], 0
    // Predicated region
    $region2: #{tpu_custom_call.1} parent=1 // pred_check
      _
    $region3: #{tpu_custom_call.1} parent=1 // pred_check_branch
      %14 = sbr.rel (0) target = $region5
    $region4: #{tpu_custom_call.1} parent=1 // pred_region
      _
    $region5: #{tpu_custom_call.1} parent=1 // pred_fallthru
      _
    // Predicated region
    $region6: #{tpu_custom_call.1} parent=1 // pred_check
      _
    $region7: #{tpu_custom_call.1} parent=1 // pred_check_branch
      %16 = sbr.rel (0) target = $region9
    $region8: #{tpu_custom_call.1} parent=1 // pred_region
      _
    $region9: #{tpu_custom_call.1} parent=1 // pred_fallthru
      _
    // Predicated region
    $region10: #{tpu_custom_call.1} parent=1 // pred_check
      _
    $region11: #{tpu_custom_call.1} parent=1 // pred_check_branch
      %18 = sbr.rel (0) target = $region13
    $region12: #{tpu_custom_call.1} parent=1 // pred_region
      _
    $region13: #{tpu_custom_call.1} parent=1 // pred_fallthru
      _
    // Predicated region
    $region14: #{tpu_custom_call.1} parent=1 // pred_check
      _
    $region15: #{tpu_custom_call.1} parent=1 // pred_check_branch
      %20 = sbr.rel (0) target = $region17
    $region16: #{tpu_custom_call.1} parent=1 // pred_region
      _
    $region17: #{tpu_custom_call.1} parent=1 // pred_fallthru
      _
    // Predicated region
    $region18: #{tpu_custom_call.1} parent=1 // pred_check
      _
    $region19: #{tpu_custom_call.1} parent=1 // pred_check_branch
      %22 = sbr.rel (0) target = $region21
    $region20: #{tpu_custom_call.1} parent=1 // pred_region
      _
    $region21: #{tpu_custom_call.1} parent=1 // pred_fallthru
      _
    // Predicated region
    $region22: #{tpu_custom_call.1} parent=1 // pred_check
      _
    $region23: #{tpu_custom_call.1} parent=1 // pred_check_branch
      %24 = sbr.rel (0) target = $region25
    $region24: #{tpu_custom_call.1} parent=1 // pred_region
      _
    $region25: #{tpu_custom_call.1} parent=1 // pred_fallthru
      _
    // Predicated region
    $region26: #{tpu_custom_call.1} parent=1 // pred_check
      _
    $region27: #{tpu_custom_call.1} parent=1 // pred_check_branch
      %26 = sbr.rel (0) target = $region29
    $region28: #{tpu_custom_call.1} parent=1 // pred_region
      _
    $region29: #{tpu_custom_call.1} parent=1 // pred_fallthru
      _
    %v27 = vld [vmem:[%s0] sm:$0xff]
    %v28 = vld [vmem:[%s1] sm:$0xff]
    %v29 = vld [vmem:[%s1 + $0x8] sm:$0xff]
    %v30 = vld [vmem:[%s2] sm:$0x1]
    %v32 = vlaneseq
    %v33 = vshrl.u32 %v32, 7
    %v34 = vsub.s32 0, %v33
    %v35 = vrot.slane %v30, %v34
    %vm37 = vcmask 130048
    %v39 = vsel %vm37, %v27, 0
    %41 = vmatprep.subr.mxu0 0.0
    %42 = vmatpush1.msra.mxu0 %v28
    %43 = vmatprep.subr.mxu0 0.0
    %44 = vmatpush1.msra.mxu0 %v29
    %45 = vmatprep.subr.mxu0 0.0
    %46 = vmatpush1.msra.mxu0 0.0
    %47 = vmatprep.subr.mxu0 0.0
    %48 = vmatpush1.msra.mxu0 0.0
    %49 = vmatprep.subr.mxu0 0.0
    %50 = vmatpush1.msra.mxu0 0.0
    %51 = vmatprep.subr.mxu0 0.0
    %52 = vmatpush1.msra.mxu0 0.0
    %53 = vmatprep.subr.mxu0 0.0
    %54 = vmatpush1.msra.mxu0 0.0
    %55 = vmatprep.subr.mxu0 0.0
    %56 = vmatpush1.msra.mxu0 0.0
    %57 = vmatprep.subr.mxu0 0.0
    %58 = vmatpush1.msra.mxu0 0.0
    %59 = vmatprep.subr.mxu0 0.0
    %60 = vmatpush1.msra.mxu0 0.0
    %61 = vmatprep.subr.mxu0 0.0
    %62 = vmatpush1.msra.mxu0 0.0
    %63 = vmatprep.subr.mxu0 0.0
    %64 = vmatpush1.msra.mxu0 0.0
    %65 = vmatprep.subr.mxu0 0.0
    %66 = vmatpush1.msra.mxu0 0.0
    %67 = vmatprep.subr.mxu0 0.0
    %68 = vmatpush1.msra.mxu0 0.0
    %69 = vmatprep.subr.mxu0 0.0
    %70 = vmatpush1.msra.mxu0 0.0
    %71 = vmatprep.subr.mxu0 0.0
    %72 = vmatpush1.msra.mxu0 0.0
    %73 = vmatprep.subr.mxu0 0.0
    %74 = vmatpush1.msra.mxu0 0.0
    %75 = vmatprep.subr.mxu0 0.0
    %76 = vmatpush1.msra.mxu0 0.0
    %77 = vmatprep.subr.mxu0 0.0
    %78 = vmatpush1.msra.mxu0 0.0
    %79 = vmatprep.subr.mxu0 0.0
    %80 = vmatpush1.msra.mxu0 0.0
    %81 = vmatprep.subr.mxu0 0.0
    %82 = vmatpush1.msra.mxu0 0.0
    %83 = vmatprep.subr.mxu0 0.0
    %84 = vmatpush1.msra.mxu0 0.0
    %85 = vmatprep.subr.mxu0 0.0
    %86 = vmatpush1.msra.mxu0 0.0
    %87 = vmatprep.subr.mxu0 0.0
    %88 = vmatpush1.msra.mxu0 0.0
    %89 = vmatprep.subr.mxu0 0.0
    %90 = vmatpush1.msra.mxu0 0.0
    %91 = vmatprep.subr.mxu0 0.0
    %92 = vmatpush1.msra.mxu0 0.0
    %93 = vmatprep.subr.mxu0 0.0
    %94 = vmatpush1.msra.mxu0 0.0
    %95 = vmatprep.subr.mxu0 0.0
    %96 = vmatpush1.msra.mxu0 0.0
    %97 = vmatprep.subr.mxu0 0.0
    %98 = vmatpush1.msra.mxu0 0.0
    %99 = vmatprep.subr.mxu0 0.0
    %100 = vmatpush1.msra.mxu0 0.0
    %101 = vmatprep.subr.mxu0 0.0
    %102 = vmatpush1.msra.mxu0 0.0
    %103 = vmatprep.subr.mxu0 0.0
    %104 = vmatpush1.msra.mxu0 0.0
    %105 = vmatprep.mubr.f32.mxu0 0.0
    %106 = vmatmul.mubr.f32.gmra.mrb[0].mxu0 %v39
    %v107 = vpop.f32.mrb[0].mxu0
    %v108 = vadd.f32 %v35, %v107
    %v109 = vpop.f32.mrb[0].mxu0
    %110 = vdwg.mxu0
    %v111 = vtanh.pop %v108
    %v112 = vld [vmem:[%s3] sm:$0xff]
    %v113 = vld [vmem:[%s3 + $0x8] sm:$0xff]
    %v114 = vld [vmem:[%s3 + $0x10] sm:$0xff]
    %v115 = vld [vmem:[%s3 + $0x18] sm:$0xff]
    %v116 = vld [vmem:[%s3 + $0x20] sm:$0xff]
    %v117 = vld [vmem:[%s3 + $0x28] sm:$0xff]
    %v118 = vld [vmem:[%s3 + $0x30] sm:$0xff]
    %v119 = vld [vmem:[%s3 + $0x38] sm:$0xff]
    %v120 = vld [vmem:[%s3 + $0x40] sm:$0xff]
    %v121 = vld [vmem:[%s3 + $0x48] sm:$0xff]
    %v122 = vld [vmem:[%s3 + $0x50] sm:$0xff]
    %v123 = vld [vmem:[%s3 + $0x58] sm:$0xff]
    %v124 = vld [vmem:[%s3 + $0x60] sm:$0xff]
    %v125 = vld [vmem:[%s3 + $0x68] sm:$0xff]
    %v126 = vld [vmem:[%s3 + $0x70] sm:$0xff]
    %v127 = vld [vmem:[%s3 + $0x78] sm:$0xff]
    %v128 = vld [vmem:[%s4] sm:$0x1]
    %v130 = vlaneseq
    %v131 = vshrl.u32 %v130, 7
    %v132 = vsub.s32 0, %v131
    %v133 = vrot.slane %v128, %v132
    %135 = vmatprep.subr.mxu0 0.0
    %136 = vmatpush1.msra.mxu0 %v112
    %137 = vmatprep.subr.mxu0 0.0
    %138 = vmatpush1.msra.mxu0 %v113
    %139 = vmatprep.subr.mxu0 0.0
    %140 = vmatpush1.msra.mxu0 %v114
    %141 = vmatprep.subr.mxu0 0.0
    %142 = vmatpush1.msra.mxu0 %v115
    %143 = vmatprep.subr.mxu0 0.0
    %144 = vmatpush1.msra.mxu0 %v116
    %145 = vmatprep.subr.mxu0 0.0
    %146 = vmatpush1.msra.mxu0 %v117
    %147 = vmatprep.subr.mxu0 0.0
    %148 = vmatpush1.msra.mxu0 %v118
    %149 = vmatprep.subr.mxu0 0.0
    %150 = vmatpush1.msra.mxu0 %v119
    %151 = vmatprep.subr.mxu0 0.0
    %152 = vmatpush1.msra.mxu0 %v120
    %153 = vmatprep.subr.mxu0 0.0
    %154 = vmatpush1.msra.mxu0 %v121
    %155 = vmatprep.subr.mxu0 0.0
    %156 = vmatpush1.msra.mxu0 %v122
    %157 = vmatprep.subr.mxu0 0.0
    %158 = vmatpush1.msra.mxu0 %v123
    %159 = vmatprep.subr.mxu0 0.0
    %160 = vmatpush1.msra.mxu0 %v124
    %161 = vmatprep.subr.mxu0 0.0
    %162 = vmatpush1.msra.mxu0 %v125
    %163 = vmatprep.subr.mxu0 0.0
    %164 = vmatpush1.msra.mxu0 %v126
    %165 = vmatprep.subr.mxu0 0.0
    %166 = vmatpush1.msra.mxu0 %v127
    %167 = vmatprep.subr.mxu0 0.0
    %168 = vmatpush1.msra.mxu0 0.0
    %169 = vmatprep.subr.mxu0 0.0
    %170 = vmatpush1.msra.mxu0 0.0
    %171 = vmatprep.subr.mxu0 0.0
    %172 = vmatpush1.msra.mxu0 0.0
    %173 = vmatprep.subr.mxu0 0.0
    %174 = vmatpush1.msra.mxu0 0.0
    %175 = vmatprep.subr.mxu0 0.0
    %176 = vmatpush1.msra.mxu0 0.0
    %177 = vmatprep.subr.mxu0 0.0
    %178 = vmatpush1.msra.mxu0 0.0
    %179 = vmatprep.subr.mxu0 0.0
    %180 = vmatpush1.msra.mxu0 0.0
    %181 = vmatprep.subr.mxu0 0.0
    %182 = vmatpush1.msra.mxu0 0.0
    %183 = vmatprep.subr.mxu0 0.0
    %184 = vmatpush1.msra.mxu0 0.0
    %185 = vmatprep.subr.mxu0 0.0
    %186 = vmatpush1.msra.mxu0 0.0
    %187 = vmatprep.subr.mxu0 0.0
    %188 = vmatpush1.msra.mxu0 0.0
    %189 = vmatprep.subr.mxu0 0.0
    %190 = vmatpush1.msra.mxu0 0.0
    %191 = vmatprep.subr.mxu0 0.0
    %192 = vmatpush1.msra.mxu0 0.0
    %193 = vmatprep.subr.mxu0 0.0
    %194 = vmatpush1.msra.mxu0 0.0
    %195 = vmatprep.subr.mxu0 0.0
    %196 = vmatpush1.msra.mxu0 0.0
    %197 = vmatprep.subr.mxu0 0.0
    %198 = vmatpush1.msra.mxu0 0.0
    %199 = vmatprep.mubr.f32.mxu0 0.0
    %200 = vmatmul.mubr.f32.gmra.mrb[0].mxu0 %v111
    %v201 = vpop.f32.mrb[0].mxu0
    %v202 = vadd.f32 %v133, %v201
    %v203 = vpop.f32.mrb[0].mxu0
    %204 = vdwg.mxu0
    %v205 = vtanh.pop %v202
    %v206 = vld [vmem:[%s5] sm:$0xff]
    %v207 = vld [vmem:[%s5 + $0x8] sm:$0xff]
    %v208 = vld [vmem:[%s5 + $0x10] sm:$0xff]
    %v209 = vld [vmem:[%s5 + $0x18] sm:$0xff]
    %v210 = vld [vmem:[%s5 + $0x20] sm:$0xff]
    %v211 = vld [vmem:[%s5 + $0x28] sm:$0xff]
    %v212 = vld [vmem:[%s5 + $0x30] sm:$0xff]
    %v213 = vld [vmem:[%s5 + $0x38] sm:$0xff]
    %v214 = vld [vmem:[%s5 + $0x40] sm:$0xff]
    %v215 = vld [vmem:[%s5 + $0x48] sm:$0xff]
    %v216 = vld [vmem:[%s5 + $0x50] sm:$0xff]
    %v217 = vld [vmem:[%s5 + $0x58] sm:$0xff]
    %v218 = vld [vmem:[%s5 + $0x60] sm:$0xff]
    %v219 = vld [vmem:[%s5 + $0x68] sm:$0xff]
    %v220 = vld [vmem:[%s5 + $0x70] sm:$0xff]
    %v221 = vld [vmem:[%s5 + $0x78] sm:$0xff]
    %v222 = vld [vmem:[%s6] sm:$0x1]
    %v224 = vlaneseq
    %v225 = vshrl.u32 %v224, 7
    %v226 = vsub.s32 0, %v225
    %v227 = vrot.slane %v222, %v226
    %229 = vmatprep.subr.mxu0 0.0
    %230 = vmatpush1.msra.mxu0 %v206
    %231 = vmatprep.subr.mxu0 0.0
    %232 = vmatpush1.msra.mxu0 %v207
    %233 = vmatprep.subr.mxu0 0.0
    %234 = vmatpush1.msra.mxu0 %v208
    %235 = vmatprep.subr.mxu0 0.0
    %236 = vmatpush1.msra.mxu0 %v209
    %237 = vmatprep.subr.mxu0 0.0
    %238 = vmatpush1.msra.mxu0 %v210
    %239 = vmatprep.subr.mxu0 0.0
    %240 = vmatpush1.msra.mxu0 %v211
    %241 = vmatprep.subr.mxu0 0.0
    %242 = vmatpush1.msra.mxu0 %v212
    %243 = vmatprep.subr.mxu0 0.0
    %244 = vmatpush1.msra.mxu0 %v213
    %245 = vmatprep.subr.mxu0 0.0
    %246 = vmatpush1.msra.mxu0 %v214
    %247 = vmatprep.subr.mxu0 0.0
    %248 = vmatpush1.msra.mxu0 %v215
    %249 = vmatprep.subr.mxu0 0.0
    %250 = vmatpush1.msra.mxu0 %v216
    %251 = vmatprep.subr.mxu0 0.0
    %252 = vmatpush1.msra.mxu0 %v217
    %253 = vmatprep.subr.mxu0 0.0
    %254 = vmatpush1.msra.mxu0 %v218
    %255 = vmatprep.subr.mxu0 0.0
    %256 = vmatpush1.msra.mxu0 %v219
    %257 = vmatprep.subr.mxu0 0.0
    %258 = vmatpush1.msra.mxu0 %v220
    %259 = vmatprep.subr.mxu0 0.0
    %260 = vmatpush1.msra.mxu0 %v221
    %261 = vmatprep.subr.mxu0 0.0
    %262 = vmatpush1.msra.mxu0 0.0
    %263 = vmatprep.subr.mxu0 0.0
    %264 = vmatpush1.msra.mxu0 0.0
    %265 = vmatprep.subr.mxu0 0.0
    %266 = vmatpush1.msra.mxu0 0.0
    %267 = vmatprep.subr.mxu0 0.0
    %268 = vmatpush1.msra.mxu0 0.0
    %269 = vmatprep.subr.mxu0 0.0
    %270 = vmatpush1.msra.mxu0 0.0
    %271 = vmatprep.subr.mxu0 0.0
    %272 = vmatpush1.msra.mxu0 0.0
    %273 = vmatprep.subr.mxu0 0.0
    %274 = vmatpush1.msra.mxu0 0.0
    %275 = vmatprep.subr.mxu0 0.0
    %276 = vmatpush1.msra.mxu0 0.0
    %277 = vmatprep.subr.mxu0 0.0
    %278 = vmatpush1.msra.mxu0 0.0
    %279 = vmatprep.subr.mxu0 0.0
    %280 = vmatpush1.msra.mxu0 0.0
    %281 = vmatprep.subr.mxu0 0.0
    %282 = vmatpush1.msra.mxu0 0.0
    %283 = vmatprep.subr.mxu0 0.0
    %284 = vmatpush1.msra.mxu0 0.0
    %285 = vmatprep.subr.mxu0 0.0
    %286 = vmatpush1.msra.mxu0 0.0
    %287 = vmatprep.subr.mxu0 0.0
    %288 = vmatpush1.msra.mxu0 0.0
    %289 = vmatprep.subr.mxu0 0.0
    %290 = vmatpush1.msra.mxu0 0.0
    %291 = vmatprep.subr.mxu0 0.0
    %292 = vmatpush1.msra.mxu0 0.0
    %293 = vmatprep.mubr.f32.mxu0 0.0
    %294 = vmatmul.mubr.f32.gmra.mrb[0].mxu0 %v205
    %v295 = vpop.f32.mrb[0].mxu0
    %v296 = vadd.f32 %v227, %v295
    %v297 = vpop.f32.mrb[0].mxu0
    %298 = vdwg.mxu0
    %vm299 = vcmask 261120
    %300 = vst.msk [vmem:[#allocation2] sm:$0xff] %vm299, %v296
    // Predicated region
    $region30: #{tpu_custom_call.1} parent=1 // pred_check
      _
    $region31: #{tpu_custom_call.1} parent=1 // pred_check_branch
      %302 = sbr.rel (0) target = $region33
    $region32: #{tpu_custom_call.1} parent=1 // pred_region
      %s304 = ssub.s32 128, 128
      %305 = vsyncadd [#allocation3], %s304
      %s307 = sshll.u32 [#allocation2], 4
      %s308 = int_to_ptr.vmem [resolvable:$true] %s307
      %310 = dma.vmem_to_hbm [thread:$0]  %s308, 128, %s7, [#allocation3]
    $region33: #{tpu_custom_call.1} parent=1 // pred_fallthru
      _
    // Predicated region
    $region34: #{tpu_custom_call.1} parent=1 // pred_check
      _
    $region35: #{tpu_custom_call.1} parent=1 // pred_check_branch
      %312 = sbr.rel (0) target = $region37
    $region36: #{tpu_custom_call.1} parent=1 // pred_region
      %313 = dma.done [#allocation3], 128
    $region37: #{tpu_custom_call.1} parent=1 // pred_fallthru
      _
    %314 = vsyncpa [#allocation3], 1

// kernel: tpu_custom_call.1
$region0: #{tpu_custom_call.1}
  #allocation0 [shape = 'u32[]', space=smem, size = 0x4, offset = 0x4, fixed_abs, tag = 'smem constant byte address 0x4 - core index']
  #allocation1 [shape = 'u32[144,128]{1,0:T(1,128)}', space=vmem, size = 0x12000, scoped, tag = 'internal scratch']
  %s0 = inlined_call_operand.vmem [shape: f32[8,16], index: 0, kind: input, shape index: {}]
  %s1 = inlined_call_operand.vmem [shape: f32[16,128], index: 1, kind: input, shape index: {}]
  %s2 = inlined_call_operand.vmem [shape: f32[1,128], index: 2, kind: input, shape index: {}]
  %s3 = inlined_call_operand.vmem [shape: f32[128,128], index: 3, kind: input, shape index: {}]
  %s4 = inlined_call_operand.vmem [shape: f32[1,128], index: 4, kind: input, shape index: {}]
  %s5 = inlined_call_operand.vmem [shape: f32[128,32], index: 5, kind: input, shape index: {}]
  %s6 = inlined_call_operand.vmem [shape: f32[1,32], index: 6, kind: input, shape index: {}]
  %s7 = inlined_call_operand.hbm [shape: f32[8,32], index: 7, kind: output, shape index: {}]
  %s8 = sld [smem:[#allocation0]]
  $region38: #{tpu_custom_call.1} parent=0
    _
  %s10 = ssub.s32 1, %s8
  %s11 = scalar_select 0, %s10, %s8
  $region1: #{tpu_custom_call.1} parent=0
    #allocation2 [shape = 'u8[4096]{0}', space=vmem, size = 0x1000, scoped, tag = 'output window, operand 0, single buffered']
    #allocation3 [shape = 's32[1]{0}', space=sflag, size = 0x4, scoped, tag = 'scoped memory for tpu_custom_call.1']
    %12 = vsyncpa [#allocation3], 0
    // Predicated region
    $region2: #{tpu_custom_call.1} parent=1 // pred_check
      _
    $region3: #{tpu_custom_call.1} parent=1 // pred_check_branch
      %14 = sbr.rel (0) target = $region5
    $region4: #{tpu_custom_call.1} parent=1 // pred_region
      _
    $region5: #{tpu_custom_call.1} parent=1 // pred_fallthru
      _
    // Predicated region
    $region6: #{tpu_custom_call.1} parent=1 // pred_check
      _
    $region7: #{tpu_custom_call.1} parent=1 // pred_check_branch
      %16 = sbr.rel (0) target = $region9
    $region8: #{tpu_custom_call.1} parent=1 // pred_region
      _
    $region9: #{tpu_custom_call.1} parent=1 // pred_fallthru
      _
    // Predicated region
    $region10: #{tpu_custom_call.1} parent=1 // pred_check
      _
    $region11: #{tpu_custom_call.1} parent=1 // pred_check_branch
      %18 = sbr.rel (0) target = $region13
    $region12: #{tpu_custom_call.1} parent=1 // pred_region
      _
    $region13: #{tpu_custom_call.1} parent=1 // pred_fallthru
      _
    // Predicated region
    $region14: #{tpu_custom_call.1} parent=1 // pred_check
      _
    $region15: #{tpu_custom_call.1} parent=1 // pred_check_branch
      %20 = sbr.rel (0) target = $region17
    $region16: #{tpu_custom_call.1} parent=1 // pred_region
      _
    $region17: #{tpu_custom_call.1} parent=1 // pred_fallthru
      _
    // Predicated region
    $region18: #{tpu_custom_call.1} parent=1 // pred_check
      _
    $region19: #{tpu_custom_call.1} parent=1 // pred_check_branch
      %22 = sbr.rel (0) target = $region21
    $region20: #{tpu_custom_call.1} parent=1 // pred_region
      _
    $region21: #{tpu_custom_call.1} parent=1 // pred_fallthru
      _
    // Predicated region
    $region22: #{tpu_custom_call.1} parent=1 // pred_check
      _
    $region23: #{tpu_custom_call.1} parent=1 // pred_check_branch
      %24 = sbr.rel (0) target = $region25
    $region24: #{tpu_custom_call.1} parent=1 // pred_region
      _
    $region25: #{tpu_custom_call.1} parent=1 // pred_fallthru
      _
    // Predicated region
    $region26: #{tpu_custom_call.1} parent=1 // pred_check
      _
    $region27: #{tpu_custom_call.1} parent=1 // pred_check_branch
      %26 = sbr.rel (0) target = $region29
    $region28: #{tpu_custom_call.1} parent=1 // pred_region
      _
    $region29: #{tpu_custom_call.1} parent=1 // pred_fallthru
      _
    %v27 = vld [vmem:[%s0] sm:$0xff]
    %v28 = vld [vmem:[%s1] sm:$0xff]
    %v29 = vld [vmem:[%s1 + $0x8] sm:$0xff]
    %v30 = vld [vmem:[%s2] sm:$0x1]
    %v32 = vlaneseq
    %v33 = vshrl.u32 %v32, 7
    %v34 = vsub.s32 0, %v33
    %v35 = vrot.slane %v30, %v34
    %vm37 = vcmask 130048
    %v39 = vsel %vm37, %v27, 0
    %41 = vmatprep.subr.mxu0 0.0
    %42 = vmatpush1.msra.mxu0 %v28
    %43 = vmatprep.subr.mxu0 0.0
    %44 = vmatpush1.msra.mxu0 %v29
    %45 = vmatprep.subr.mxu0 0.0
    %46 = vmatpush1.msra.mxu0 0.0
    %47 = vmatprep.subr.mxu0 0.0
    %48 = vmatpush1.msra.mxu0 0.0
    %49 = vmatprep.subr.mxu0 0.0
    %50 = vmatpush1.msra.mxu0 0.0
    %51 = vmatprep.subr.mxu0 0.0
    %52 = vmatpush1.msra.mxu0 0.0
    %53 = vmatprep.subr.mxu0 0.0
    %54 = vmatpush1.msra.mxu0 0.0
    %55 = vmatprep.subr.mxu0 0.0
    %56 = vmatpush1.msra.mxu0 0.0
    %57 = vmatprep.subr.mxu0 0.0
    %58 = vmatpush1.msra.mxu0 0.0
    %59 = vmatprep.subr.mxu0 0.0
    %60 = vmatpush1.msra.mxu0 0.0
    %61 = vmatprep.subr.mxu0 0.0
    %62 = vmatpush1.msra.mxu0 0.0
    %63 = vmatprep.subr.mxu0 0.0
    %64 = vmatpush1.msra.mxu0 0.0
    %65 = vmatprep.subr.mxu0 0.0
    %66 = vmatpush1.msra.mxu0 0.0
    %67 = vmatprep.subr.mxu0 0.0
    %68 = vmatpush1.msra.mxu0 0.0
    %69 = vmatprep.subr.mxu0 0.0
    %70 = vmatpush1.msra.mxu0 0.0
    %71 = vmatprep.subr.mxu0 0.0
    %72 = vmatpush1.msra.mxu0 0.0
    %73 = vmatprep.subr.mxu0 0.0
    %74 = vmatpush1.msra.mxu0 0.0
    %75 = vmatprep.subr.mxu0 0.0
    %76 = vmatpush1.msra.mxu0 0.0
    %77 = vmatprep.subr.mxu0 0.0
    %78 = vmatpush1.msra.mxu0 0.0
    %79 = vmatprep.subr.mxu0 0.0
    %80 = vmatpush1.msra.mxu0 0.0
    %81 = vmatprep.subr.mxu0 0.0
    %82 = vmatpush1.msra.mxu0 0.0
    %83 = vmatprep.subr.mxu0 0.0
    %84 = vmatpush1.msra.mxu0 0.0
    %85 = vmatprep.subr.mxu0 0.0
    %86 = vmatpush1.msra.mxu0 0.0
    %87 = vmatprep.subr.mxu0 0.0
    %88 = vmatpush1.msra.mxu0 0.0
    %89 = vmatprep.subr.mxu0 0.0
    %90 = vmatpush1.msra.mxu0 0.0
    %91 = vmatprep.subr.mxu0 0.0
    %92 = vmatpush1.msra.mxu0 0.0
    %93 = vmatprep.subr.mxu0 0.0
    %94 = vmatpush1.msra.mxu0 0.0
    %95 = vmatprep.subr.mxu0 0.0
    %96 = vmatpush1.msra.mxu0 0.0
    %97 = vmatprep.subr.mxu0 0.0
    %98 = vmatpush1.msra.mxu0 0.0
    %99 = vmatprep.subr.mxu0 0.0
    %100 = vmatpush1.msra.mxu0 0.0
    %101 = vmatprep.subr.mxu0 0.0
    %102 = vmatpush1.msra.mxu0 0.0
    %103 = vmatprep.subr.mxu0 0.0
    %104 = vmatpush1.msra.mxu0 0.0
    %105 = vmatprep.mubr.f32.mxu0 0.0
    %106 = vmatmul.mubr.f32.gmra.mrb[0].mxu0 %v39
    %v107 = vpop.f32.mrb[0].mxu0
    %v108 = vadd.f32 %v35, %v107
    %v109 = vpop.f32.mrb[0].mxu0
    %110 = vdwg.mxu0
    %v111 = vtanh.pop %v108
    %v112 = vld [vmem:[%s3] sm:$0xff]
    %v113 = vld [vmem:[%s3 + $0x8] sm:$0xff]
    %v114 = vld [vmem:[%s3 + $0x10] sm:$0xff]
    %v115 = vld [vmem:[%s3 + $0x18] sm:$0xff]
    %v116 = vld [vmem:[%s3 + $0x20] sm:$0xff]
    %v117 = vld [vmem:[%s3 + $0x28] sm:$0xff]
    %v118 = vld [vmem:[%s3 + $0x30] sm:$0xff]
    %v119 = vld [vmem:[%s3 + $0x38] sm:$0xff]
    %v120 = vld [vmem:[%s3 + $0x40] sm:$0xff]
    %v121 = vld [vmem:[%s3 + $0x48] sm:$0xff]
    %v122 = vld [vmem:[%s3 + $0x50] sm:$0xff]
    %v123 = vld [vmem:[%s3 + $0x58] sm:$0xff]
    %v124 = vld [vmem:[%s3 + $0x60] sm:$0xff]
    %v125 = vld [vmem:[%s3 + $0x68] sm:$0xff]
    %v126 = vld [vmem:[%s3 + $0x70] sm:$0xff]
    %v127 = vld [vmem:[%s3 + $0x78] sm:$0xff]
    %v128 = vld [vmem:[%s4] sm:$0x1]
    %v130 = vlaneseq
    %v131 = vshrl.u32 %v130, 7
    %v132 = vsub.s32 0, %v131
    %v133 = vrot.slane %v128, %v132
    %135 = vmatprep.subr.mxu0 0.0
    %136 = vmatpush1.msra.mxu0 %v112
    %137 = vmatprep.subr.mxu0 0.0
    %138 = vmatpush1.msra.mxu0 %v113
    %139 = vmatprep.subr.mxu0 0.0
    %140 = vmatpush1.msra.mxu0 %v114
    %141 = vmatprep.subr.mxu0 0.0
    %142 = vmatpush1.msra.mxu0 %v115
    %143 = vmatprep.subr.mxu0 0.0
    %144 = vmatpush1.msra.mxu0 %v116
    %145 = vmatprep.subr.mxu0 0.0
    %146 = vmatpush1.msra.mxu0 %v117
    %147 = vmatprep.subr.mxu0 0.0
    %148 = vmatpush1.msra.mxu0 %v118
    %149 = vmatprep.subr.mxu0 0.0
    %150 = vmatpush1.msra.mxu0 %v119
    %151 = vmatprep.subr.mxu0 0.0
    %152 = vmatpush1.msra.mxu0 %v120
    %153 = vmatprep.subr.mxu0 0.0
    %154 = vmatpush1.msra.mxu0 %v121
    %155 = vmatprep.subr.mxu0 0.0
    %156 = vmatpush1.msra.mxu0 %v122
    %157 = vmatprep.subr.mxu0 0.0
    %158 = vmatpush1.msra.mxu0 %v123
    %159 = vmatprep.subr.mxu0 0.0
    %160 = vmatpush1.msra.mxu0 %v124
    %161 = vmatprep.subr.mxu0 0.0
    %162 = vmatpush1.msra.mxu0 %v125
    %163 = vmatprep.subr.mxu0 0.0
    %164 = vmatpush1.msra.mxu0 %v126
    %165 = vmatprep.subr.mxu0 0.0
    %166 = vmatpush1.msra.mxu0 %v127
    %167 = vmatprep.subr.mxu0 0.0
    %168 = vmatpush1.msra.mxu0 0.0
    %169 = vmatprep.subr.mxu0 0.0
    %170 = vmatpush1.msra.mxu0 0.0
    %171 = vmatprep.subr.mxu0 0.0
    %172 = vmatpush1.msra.mxu0 0.0
    %173 = vmatprep.subr.mxu0 0.0
    %174 = vmatpush1.msra.mxu0 0.0
    %175 = vmatprep.subr.mxu0 0.0
    %176 = vmatpush1.msra.mxu0 0.0
    %177 = vmatprep.subr.mxu0 0.0
    %178 = vmatpush1.msra.mxu0 0.0
    %179 = vmatprep.subr.mxu0 0.0
    %180 = vmatpush1.msra.mxu0 0.0
    %181 = vmatprep.subr.mxu0 0.0
    %182 = vmatpush1.msra.mxu0 0.0
    %183 = vmatprep.subr.mxu0 0.0
    %184 = vmatpush1.msra.mxu0 0.0
    %185 = vmatprep.subr.mxu0 0.0
    %186 = vmatpush1.msra.mxu0 0.0
    %187 = vmatprep.subr.mxu0 0.0
    %188 = vmatpush1.msra.mxu0 0.0
    %189 = vmatprep.subr.mxu0 0.0
    %190 = vmatpush1.msra.mxu0 0.0
    %191 = vmatprep.subr.mxu0 0.0
    %192 = vmatpush1.msra.mxu0 0.0
    %193 = vmatprep.subr.mxu0 0.0
    %194 = vmatpush1.msra.mxu0 0.0
    %195 = vmatprep.subr.mxu0 0.0
    %196 = vmatpush1.msra.mxu0 0.0
    %197 = vmatprep.subr.mxu0 0.0
    %198 = vmatpush1.msra.mxu0 0.0
    %199 = vmatprep.mubr.f32.mxu0 0.0
    %200 = vmatmul.mubr.f32.gmra.mrb[0].mxu0 %v111
    %v201 = vpop.f32.mrb[0].mxu0
    %v202 = vadd.f32 %v133, %v201
    %v203 = vpop.f32.mrb[0].mxu0
    %204 = vdwg.mxu0
    %v205 = vtanh.pop %v202
    %v206 = vld [vmem:[%s5] sm:$0xff]
    %v207 = vld [vmem:[%s5 + $0x8] sm:$0xff]
    %v208 = vld [vmem:[%s5 + $0x10] sm:$0xff]
    %v209 = vld [vmem:[%s5 + $0x18] sm:$0xff]
    %v210 = vld [vmem:[%s5 + $0x20] sm:$0xff]
    %v211 = vld [vmem:[%s5 + $0x28] sm:$0xff]
    %v212 = vld [vmem:[%s5 + $0x30] sm:$0xff]
    %v213 = vld [vmem:[%s5 + $0x38] sm:$0xff]
    %v214 = vld [vmem:[%s5 + $0x40] sm:$0xff]
    %v215 = vld [vmem:[%s5 + $0x48] sm:$0xff]
    %v216 = vld [vmem:[%s5 + $0x50] sm:$0xff]
    %v217 = vld [vmem:[%s5 + $0x58] sm:$0xff]
    %v218 = vld [vmem:[%s5 + $0x60] sm:$0xff]
    %v219 = vld [vmem:[%s5 + $0x68] sm:$0xff]
    %v220 = vld [vmem:[%s5 + $0x70] sm:$0xff]
    %v221 = vld [vmem:[%s5 + $0x78] sm:$0xff]
    %v222 = vld [vmem:[%s6] sm:$0x1]
    %v224 = vlaneseq
    %v225 = vshrl.u32 %v224, 7
    %v226 = vsub.s32 0, %v225
    %v227 = vrot.slane %v222, %v226
    %229 = vmatprep.subr.mxu0 0.0
    %230 = vmatpush1.msra.mxu0 %v206
    %231 = vmatprep.subr.mxu0 0.0
    %232 = vmatpush1.msra.mxu0 %v207
    %233 = vmatprep.subr.mxu0 0.0
    %234 = vmatpush1.msra.mxu0 %v208
    %235 = vmatprep.subr.mxu0 0.0
    %236 = vmatpush1.msra.mxu0 %v209
    %237 = vmatprep.subr.mxu0 0.0
    %238 = vmatpush1.msra.mxu0 %v210
    %239 = vmatprep.subr.mxu0 0.0
    %240 = vmatpush1.msra.mxu0 %v211
    %241 = vmatprep.subr.mxu0 0.0
    %242 = vmatpush1.msra.mxu0 %v212
    %243 = vmatprep.subr.mxu0 0.0
    %244 = vmatpush1.msra.mxu0 %v213
    %245 = vmatprep.subr.mxu0 0.0
    %246 = vmatpush1.msra.mxu0 %v214
    %247 = vmatprep.subr.mxu0 0.0
    %248 = vmatpush1.msra.mxu0 %v215
    %249 = vmatprep.subr.mxu0 0.0
    %250 = vmatpush1.msra.mxu0 %v216
    %251 = vmatprep.subr.mxu0 0.0
    %252 = vmatpush1.msra.mxu0 %v217
    %253 = vmatprep.subr.mxu0 0.0
    %254 = vmatpush1.msra.mxu0 %v218
    %255 = vmatprep.subr.mxu0 0.0
    %256 = vmatpush1.msra.mxu0 %v219
    %257 = vmatprep.subr.mxu0 0.0
    %258 = vmatpush1.msra.mxu0 %v220
    %259 = vmatprep.subr.mxu0 0.0
    %260 = vmatpush1.msra.mxu0 %v221
    %261 = vmatprep.subr.mxu0 0.0
    %262 = vmatpush1.msra.mxu0 0.0
    %263 = vmatprep.subr.mxu0 0.0
    %264 = vmatpush1.msra.mxu0 0.0
    %265 = vmatprep.subr.mxu0 0.0
    %266 = vmatpush1.msra.mxu0 0.0
    %267 = vmatprep.subr.mxu0 0.0
    %268 = vmatpush1.msra.mxu0 0.0
    %269 = vmatprep.subr.mxu0 0.0
    %270 = vmatpush1.msra.mxu0 0.0
    %271 = vmatprep.subr.mxu0 0.0
    %272 = vmatpush1.msra.mxu0 0.0
    %273 = vmatprep.subr.mxu0 0.0
    %274 = vmatpush1.msra.mxu0 0.0
    %275 = vmatprep.subr.mxu0 0.0
    %276 = vmatpush1.msra.mxu0 0.0
    %277 = vmatprep.subr.mxu0 0.0
    %278 = vmatpush1.msra.mxu0 0.0
    %279 = vmatprep.subr.mxu0 0.0
    %280 = vmatpush1.msra.mxu0 0.0
    %281 = vmatprep.subr.mxu0 0.0
    %282 = vmatpush1.msra.mxu0 0.0
    %283 = vmatprep.subr.mxu0 0.0
    %284 = vmatpush1.msra.mxu0 0.0
    %285 = vmatprep.subr.mxu0 0.0
    %286 = vmatpush1.msra.mxu0 0.0
    %287 = vmatprep.subr.mxu0 0.0
    %288 = vmatpush1.msra.mxu0 0.0
    %289 = vmatprep.subr.mxu0 0.0
    %290 = vmatpush1.msra.mxu0 0.0
    %291 = vmatprep.subr.mxu0 0.0
    %292 = vmatpush1.msra.mxu0 0.0
    %293 = vmatprep.mubr.f32.mxu0 0.0
    %294 = vmatmul.mubr.f32.gmra.mrb[0].mxu0 %v205
    %v295 = vpop.f32.mrb[0].mxu0
    %v296 = vadd.f32 %v227, %v295
    %v297 = vpop.f32.mrb[0].mxu0
    %298 = vdwg.mxu0
    %vm299 = vcmask 261120
    %300 = vst.msk [vmem:[#allocation2] sm:$0xff] %vm299, %v296
    // Predicated region
    $region30: #{tpu_custom_call.1} parent=1 // pred_check
      _
    $region31: #{tpu_custom_call.1} parent=1 // pred_check_branch
      %302 = sbr.rel (0) target = $region33
    $region32: #{tpu_custom_call.1} parent=1 // pred_region
      %s304 = ssub.s32 128, 128
      %305 = vsyncadd [#allocation3], %s304
      %s307 = sshll.u32 [#allocation2], 4
      %s308 = int_to_ptr.vmem [resolvable:$true] %s307
      %310 = dma.vmem_to_hbm [thread:$0]  %s308, 128, %s7, [#allocation3]
    $region33: #{tpu_custom_call.1} parent=1 // pred_fallthru
      _
    // Predicated region
    $region34: #{tpu_custom_call.1} parent=1 // pred_check
      _
    $region35: #{tpu_custom_call.1} parent=1 // pred_check_branch
      %312 = sbr.rel (0) target = $region37
    $region36: #{tpu_custom_call.1} parent=1 // pred_region
      %313 = dma.done [#allocation3], 128
    $region37: #{tpu_custom_call.1} parent=1 // pred_fallthru
      _
    %314 = vsyncpa [#allocation3], 1

</llo_original>
